<compile_context>
chip_gen: v7x
topology: tpu7x:2x2x1
jax: 0.10.0
libtpu: 0.0.40
codegen_flags: <defaults>
</compile_context>

<pallas_src>
import jax
import jax.numpy as jnp
from jax import lax
from jax.experimental import pallas as pl
from jax.experimental.pallas import tpu as pltpu

LN_EPS = 1e-5  # PyTorch nn.LayerNorm default


# --------------------------------------------------------------------------- #
# Kernel
# --------------------------------------------------------------------------- #
def make_ffn_kernel(hc, n_chunks):
    """Kernel factory. hc = hidden-chunk width, n_chunks = H // hc (static)."""

    def ffn_kernel(x_ref, w1_ref, b1_ref, w2_ref, b2_ref, g_ref, beta_ref,
                   o_ref, acc_ref):
        # x_ref: (tm, D) f32   w1: (D, H) bf16   b1: (1, H) f32
        # w2: (H, D) bf16      b2: (1, D) f32    g/beta: (1, D) f32
        # o_ref: (tm, D) f32   acc_ref: (tm, D) f32 scratch
        x = x_ref[...]
        xb = x.astype(jnp.bfloat16)          # bf16 operand for the MXU

        acc_ref[...] = jnp.zeros_like(acc_ref)

        # Chunk the hidden dim so only a (tm, hc) slab of the intermediate is
        # live at a time (no (tm, H) spill).  Static slices -> zero-cost views.
        for c in range(n_chunks):
            lo = c * hc
            h = jnp.dot(xb, w1_ref[:, lo:lo + hc],
                        preferred_element_type=jnp.float32)
            h = h + b1_ref[:, lo:lo + hc]
            h = jnp.maximum(h, 0.0)          # ReLU, single VALU op
            acc_ref[...] += jnp.dot(h.astype(jnp.bfloat16),
                                    w2_ref[lo:lo + hc, :],
                                    preferred_element_type=jnp.float32)

        # dropout(p) -> identity at inference; residual add in f32.
        y = acc_ref[...] + b2_ref[...] + x.astype(jnp.float32)

        # LayerNorm over the feature (lane) axis, biased variance (PyTorch).
        mean = jnp.mean(y, axis=-1, keepdims=True)
        d = y - mean
        var = jnp.mean(d * d, axis=-1, keepdims=True)
        inv = lax.rsqrt(var + LN_EPS)        # EUP slot -> cheap
        o_ref[...] = (d * inv * g_ref[...] + beta_ref[...]).astype(o_ref.dtype)

    return ffn_kernel


# --------------------------------------------------------------------------- #
# Tiling heuristics
# --------------------------------------------------------------------------- #
def _round_up(v, m):
    return ((v + m - 1) // m) * m


def _choose_hc(H):
    """Hidden-dim chunk width (lane slices of W1/W2)."""
    if H <= 512:
        return H
    for hc in (512, 256, 128):
        if H % hc == 0:
            return hc
    return H  # odd H: no chunking


def _vmem_capacity_bytes():
    try:
        return int(pltpu.get_tpu_info().vmem_capacity_bytes)
    except Exception:
        return 64 * 1024 * 1024  # be conservative: v7x has 64 MiB / TC


def _choose_tm(N, D, H, hc):
    """Row-tile size derived from the VMEM budget of the current chip."""
    if N <= 8:
        return 8
    budget = int(_vmem_capacity_bytes() * 0.6)       # headroom for the compiler
    w_bytes = 2 * D * H * 2                          # W1 + W2, bf16, single-buffered
    avail = max(budget - w_bytes - (1 << 20), 1 << 20)
    # per-row VMEM: x dbuf (8D) + out dbuf (8D) + acc (4D) + x bf16 (2D)
    #               + live hidden chunk f32+bf16 (6*hc)
    per_row = 22 * D + 6 * hc
    tm = min(avail // per_row, 1024)
    if tm >= N:
        # Everything fits in one tile.  For large N keep >=2 grid steps so the
        # "parallel" axis can shard across v7x's two TensorCores.
        if N >= 512:
            return _round_up(pl.cdiv(N, 2), 128)
        return _round_up(N, 8)
    return max(128, (tm // 128) * 128)               # lane/MXU-friendly tile


def _vmem_limit_bytes(tm, D, H, hc, single_buffer_weights):
    wbuf = (1 if single_buffer_weights else 2) * (2 * D * H * 2)   # bf16 W1+W2
    small = 4 * (H + 3 * D) * 4                                    # biases / gamma / beta
    xio = 2 * tm * D * 4 + 2 * tm * D * 4                          # x + out, double-buffered
    scratch = tm * D * 4                                           # f32 accumulator
    live = tm * hc * 6 + tm * D * 2                                # live hidden chunk + x bf16
    need = wbuf + small + xio + scratch + live
    return int(min(max(need * 3 // 2 + (2 << 20), 16 << 20), 96 << 20))


# --------------------------------------------------------------------------- #
# pallas_call wrapper
# --------------------------------------------------------------------------- #
def _pallas_ffn(x2, w1, b1, w2, b2, gamma, beta, *, tm, hc,
                single_buffer_weights):
    N, D = x2.shape
    H = w1.shape[1]
    n_chunks = max(1, H // hc)

    def const_spec(shape):
        # Constant-index operands: index_map is (0, 0) every step.
        if single_buffer_weights:
            return pl.BlockSpec(shape, lambda i: (0, 0),
                                pipeline_mode=pl.Buffered(1))
        return pl.BlockSpec(shape, lambda i: (0, 0))

    flops = 4 * N * D * H + 10 * N * D
    bytes_accessed = 2 * N * D * 4 + 2 * D * H * 2 + (H + 3 * D) * 4

    return pl.pallas_call(
        make_ffn_kernel(hc, n_chunks),
        out_shape=jax.ShapeDtypeStruct((N, D), x2.dtype),
        grid_spec=pltpu.PrefetchScalarGridSpec(
            num_scalar_prefetch=0,
            grid=(pl.cdiv(N, tm),),          # partial last block handled by Pallas
            in_specs=[
                pl.BlockSpec((tm, D), lambda i: (i, 0)),   # x tile
                const_spec((D, H)),                        # W1 (bf16, resident)
                const_spec((1, H)),                        # b1
                const_spec((H, D)),                        # W2 (bf16, resident)
                const_spec((1, D)),                        # b2
                const_spec((1, D)),                        # LayerNorm gamma
                const_spec((1, D)),                        # LayerNorm beta
            ],
            out_specs=pl.BlockSpec((tm, D), lambda i: (i, 0)),
            scratch_shapes=[pltpu.VMEM((tm, D), jnp.float32)],
        ),
        compiler_params=pltpu.CompilerParams(
            dimension_semantics=("parallel",),             # shards across v7x's 2 TCs
            vmem_limit_bytes=_vmem_limit_bytes(tm, D, H, hc,
                                               single_buffer_weights),
        ),
        cost_estimate=pl.CostEstimate(
            flops=flops, transcendentals=N, bytes_accessed=bytes_accessed),
    )(x2, w1, b1, w2, b2, gamma, beta)


def ffn_forward(x, params, *, tm=None):
    """x: (..., d_in) float32. Returns LayerNorm(W2(relu(W1(x))) + x)."""
    w1, b1, w2, b2, gamma, beta = params
    orig_shape = x.shape
    D = orig_shape[-1]
    H = w1.shape[1]
    x2 = x.reshape(-1, D)
    N = x2.shape[0]

    hc = _choose_hc(H)
    if tm is None:
        tm = _choose_tm(N, D, H, hc)

    try:
        out = _pallas_ffn(x2, w1, b1, w2, b2, gamma, beta,
                          tm=tm, hc=hc, single_buffer_weights=True)
        out = jax.block_until_ready(out)
    except Exception:
        # TODO(synk): this JAX build rejected pl.Buffered(1) single-buffering;
        # fall back to default double-buffered constant operands.
        out = _pallas_ffn(x2, w1, b1, w2, b2, gamma, beta,
                          tm=tm, hc=hc, single_buffer_weights=False)
        out = jax.block_until_ready(out)

    return out.reshape(orig_shape)


# --------------------------------------------------------------------------- #
# Params / reference
# --------------------------------------------------------------------------- #
def init_params(key, d_in, d_hid):
    """PyTorch-style Linear/LayerNorm params; weights stored transposed
    (in_features, out_features) and cast to bf16 for the MXU."""
    k1, k2, k3, k4 = jax.random.split(key, 4)

    def lin(kw, kb, fan_in, fan_out):
        bound = 1.0 / (fan_in ** 0.5)
        w = jax.random.uniform(kw, (fan_in, fan_out), jnp.float32, -bound, bound)
        b = jax.random.uniform(kb, (1, fan_out), jnp.float32, -bound, bound)
        return w.astype(jnp.bfloat16), b

    w1, b1 = lin(k1, k2, d_in, d_hid)
    w2, b2 = lin(k3, k4, d_hid, d_in)
    gamma = jnp.ones((1, d_in), jnp.float32)
    beta = jnp.zeros((1, d_in), jnp.float32)
    return (w1, b1, w2, b2, gamma, beta)


def ffn_reference(x, params):
    """Pure-JAX reference with the same bf16-operand / f32-accum matmul semantics."""
    w1, b1, w2, b2, gamma, beta = params
    h = jnp.dot(x.astype(jnp.bfloat16), w1, preferred_element_type=jnp.float32) + b1
    h = jnp.maximum(h, 0.0)
    y = jnp.dot(h.astype(jnp.bfloat16), w2, preferred_element_type=jnp.float32) + b2
    y = y + x
    mean = jnp.mean(y, axis=-1, keepdims=True)
    var = jnp.mean((y - mean) ** 2, axis=-1, keepdims=True)
    return (y - mean) * lax.rsqrt(var + LN_EPS) * gamma + beta


# --------------------------------------------------------------------------- #
# Demo / self-test
# --------------------------------------------------------------------------- #
if __name__ == "__main__":
    key = jax.random.PRNGKey(0)
    kx, kp = jax.random.split(key)

    # small shapes consistent with the module: batch=2, seq=8, d_in=32, d_hid=64
    B, L, d_in, d_hid = 2, 8, 32, 64
    x = jax.random.normal(kx, (B, L, d_in), jnp.float32)
    params = init_params(kp, d_in, d_hid)

    out = ffn_forward(x, params)
    out = jax.block_until_ready(out)

    ref = ffn_reference(x, params)
    assert out.shape == (B, L, d_in)
    err = float(jnp.max(jnp.abs(out - ref)))
    # bf16 MXU operands -> loosened tolerance vs the f32-exact module.
    assert jnp.allclose(out, ref, atol=1e-2, rtol=1e-2), err

    print("KERNEL_OK")
</pallas_src>

<mosaic_0001>
module attributes {stable_mosaic.version = 11 : i64} {
  func.func @ffn_kernel(%arg0: i32, %arg1: memref<16x32xf32, #tpu.memory_space<vmem>>, %arg2: memref<32x64xbf16, #tpu.memory_space<vmem>>, %arg3: memref<1x64xf32, #tpu.memory_space<vmem>>, %arg4: memref<64x32xbf16, #tpu.memory_space<vmem>>, %arg5: memref<1x32xf32, #tpu.memory_space<vmem>>, %arg6: memref<1x32xf32, #tpu.memory_space<vmem>>, %arg7: memref<1x32xf32, #tpu.memory_space<vmem>>, %arg8: memref<16x32xf32, #tpu.memory_space<vmem>>, %arg9: memref<16x32xf32, #tpu.memory_space<vmem>>) attributes {dimension_semantics = [#tpu.dimension_semantics<parallel>], iteration_bounds = array<i64: 1>, scalar_prefetch = 0 : i64, scratch_operands = 1 : i64, tpu.core_type = #tpu.core_type<tc>, window_params = [{transform_indices = @transform_0, window_bounds = array<i64: 16, 32>}, {pipeline_mode = #tpu.pipeline_mode<synchronous>, transform_indices = @transform_1, window_bounds = array<i64: 32, 64>}, {pipeline_mode = #tpu.pipeline_mode<synchronous>, transform_indices = @transform_2, window_bounds = array<i64: 1, 64>}, {pipeline_mode = #tpu.pipeline_mode<synchronous>, transform_indices = @transform_3, window_bounds = array<i64: 64, 32>}, {pipeline_mode = #tpu.pipeline_mode<synchronous>, transform_indices = @transform_4, window_bounds = array<i64: 1, 32>}, {pipeline_mode = #tpu.pipeline_mode<synchronous>, transform_indices = @transform_5, window_bounds = array<i64: 1, 32>}, {pipeline_mode = #tpu.pipeline_mode<synchronous>, transform_indices = @transform_6, window_bounds = array<i64: 1, 32>}, {transform_indices = @transform_7, window_bounds = array<i64: 16, 32>}]} {
    %c0 = arith.constant 0 : index
    %c0_0 = arith.constant 0 : index
    %0 = vector.load %arg1[%c0, %c0_0] : memref<16x32xf32, #tpu.memory_space<vmem>>, vector<16x32xf32>
    %1 = arith.truncf %0 : vector<16x32xf32> to vector<16x32xbf16>
    %cst = arith.constant 0.000000e+00 : f32
    %2 = vector.broadcast %cst : f32 to vector<16x32xf32>
    %c0_1 = arith.constant 0 : index
    %c0_2 = arith.constant 0 : index
    %3 = vector.load %arg9[%c0_1, %c0_2] : memref<16x32xf32, #tpu.memory_space<vmem>>, vector<16x32xf32>
    tpu.vector_store %arg9[%c0_1, %c0_2], %2 {strides = array<i32>} : memref<16x32xf32, #tpu.memory_space<vmem>>, vector<16x32xf32>,
    %c0_3 = arith.constant 0 : index
    %c0_4 = arith.constant 0 : index
    %4 = vector.load %arg2[%c0_3, %c0_4] : memref<32x64xbf16, #tpu.memory_space<vmem>>, vector<32x64xbf16>
    %cst_5 = arith.constant dense<0.000000e+00> : vector<16x64xf32>
    %5 = tpu.matmul %1, %4, %cst_5 {dimension_numbers = #tpu.dot_dimension_numbers<[1], [0], [0], [1], [0, 0, 1, 1], [], []>} : vector<16x32xbf16>, vector<32x64xbf16>, vector<16x64xf32> -> vector<16x64xf32>
    %c0_6 = arith.constant 0 : index
    %c0_7 = arith.constant 0 : index
    %6 = vector.load %arg3[%c0_6, %c0_7] : memref<1x64xf32, #tpu.memory_space<vmem>>, vector<1x64xf32>
    %7 = vector.broadcast %6 : vector<1x64xf32> to vector<16x64xf32>
    %8 = arith.addf %5, %7 : vector<16x64xf32>
    %cst_8 = arith.constant 0.000000e+00 : f32
    %9 = vector.broadcast %cst_8 : f32 to vector<16x64xf32>
    %10 = arith.maximumf %8, %9 : vector<16x64xf32>
    %c0_9 = arith.constant 0 : index
    %c0_10 = arith.constant 0 : index
    %11 = vector.load %arg9[%c0_9, %c0_10] : memref<16x32xf32, #tpu.memory_space<vmem>>, vector<16x32xf32>
    %12 = arith.truncf %10 : vector<16x64xf32> to vector<16x64xbf16>
    %c0_11 = arith.constant 0 : index
    %c0_12 = arith.constant 0 : index
    %13 = vector.load %arg4[%c0_11, %c0_12] : memref<64x32xbf16, #tpu.memory_space<vmem>>, vector<64x32xbf16>
    %cst_13 = arith.constant dense<0.000000e+00> : vector<16x32xf32>
    %14 = tpu.matmul %12, %13, %cst_13 {dimension_numbers = #tpu.dot_dimension_numbers<[1], [0], [0], [1], [0, 0, 1, 1], [], []>} : vector<16x64xbf16>, vector<64x32xbf16>, vector<16x32xf32> -> vector<16x32xf32>
    %15 = arith.addf %11, %14 : vector<16x32xf32>
    %c0_14 = arith.constant 0 : index
    %c0_15 = arith.constant 0 : index
    %16 = vector.load %arg9[%c0_14, %c0_15] : memref<16x32xf32, #tpu.memory_space<vmem>>, vector<16x32xf32>
    tpu.vector_store %arg9[%c0_14, %c0_15], %15 {strides = array<i32>} : memref<16x32xf32, #tpu.memory_space<vmem>>, vector<16x32xf32>,
    %c0_16 = arith.constant 0 : index
    %c0_17 = arith.constant 0 : index
    %17 = vector.load %arg9[%c0_16, %c0_17] : memref<16x32xf32, #tpu.memory_space<vmem>>, vector<16x32xf32>
    %c0_18 = arith.constant 0 : index
    %c0_19 = arith.constant 0 : index
    %18 = vector.load %arg5[%c0_18, %c0_19] : memref<1x32xf32, #tpu.memory_space<vmem>>, vector<1x32xf32>
    %19 = vector.broadcast %18 : vector<1x32xf32> to vector<16x32xf32>
    %20 = arith.addf %17, %19 : vector<16x32xf32>
    %21 = arith.addf %20, %0 : vector<16x32xf32>
    %cst_20 = arith.constant dense<0.000000e+00> : vector<16xf32>
    %22 = vector.multi_reduction <add>, %21, %cst_20 [1] : vector<16x32xf32> to vector<16xf32>
    %23 = vector.shape_cast %22 : vector<16xf32> to vector<16x1xf32>
    %cst_21 = arith.constant 3.200000e+01 : f32
    %24 = vector.broadcast %cst_21 : f32 to vector<16x1xf32>
    %25 = arith.divf %23, %24 : vector<16x1xf32>
    %26 = vector.broadcast %25 : vector<16x1xf32> to vector<16x32xf32>
    %27 = arith.subf %21, %26 : vector<16x32xf32>
    %28 = arith.mulf %27, %27 : vector<16x32xf32>
    %cst_22 = arith.constant dense<0.000000e+00> : vector<16xf32>
    %29 = vector.multi_reduction <add>, %28, %cst_22 [1] : vector<16x32xf32> to vector<16xf32>
    %30 = vector.shape_cast %29 : vector<16xf32> to vector<16x1xf32>
    %cst_23 = arith.constant 3.200000e+01 : f32
    %31 = vector.broadcast %cst_23 : f32 to vector<16x1xf32>
    %32 = arith.divf %30, %31 : vector<16x1xf32>
    %cst_24 = arith.constant 9.99999974E-6 : f32
    %33 = vector.broadcast %cst_24 : f32 to vector<16x1xf32>
    %34 = arith.addf %32, %33 : vector<16x1xf32>
    %35 = math.rsqrt %34 : vector<16x1xf32>
    %36 = vector.broadcast %35 : vector<16x1xf32> to vector<16x32xf32>
    %37 = arith.mulf %27, %36 : vector<16x32xf32>
    %c0_25 = arith.constant 0 : index
    %c0_26 = arith.constant 0 : index
    %38 = vector.load %arg6[%c0_25, %c0_26] : memref<1x32xf32, #tpu.memory_space<vmem>>, vector<1x32xf32>
    %39 = vector.broadcast %38 : vector<1x32xf32> to vector<16x32xf32>
    %40 = arith.mulf %37, %39 : vector<16x32xf32>
    %c0_27 = arith.constant 0 : index
    %c0_28 = arith.constant 0 : index
    %41 = vector.load %arg7[%c0_27, %c0_28] : memref<1x32xf32, #tpu.memory_space<vmem>>, vector<1x32xf32>
    %42 = vector.broadcast %41 : vector<1x32xf32> to vector<16x32xf32>
    %43 = arith.addf %40, %42 : vector<16x32xf32>
    %c0_29 = arith.constant 0 : index
    %c0_30 = arith.constant 0 : index
    %44 = vector.load %arg8[%c0_29, %c0_30] : memref<16x32xf32, #tpu.memory_space<vmem>>, vector<16x32xf32>
    tpu.vector_store %arg8[%c0_29, %c0_30], %43 {strides = array<i32>} : memref<16x32xf32, #tpu.memory_space<vmem>>, vector<16x32xf32>,
    return
  }
  func.func @transform_0(%arg0: i32) -> (i32, i32) {
    %c0_i32 = arith.constant 0 : i32
    %c0_i32_0 = arith.constant 0 : i32
    return %arg0, %c0_i32 : i32, i32
  }
  func.func @transform_1(%arg0: i32) -> (i32, i32) {
    %c0_i32 = arith.constant 0 : i32
    %c0_i32_0 = arith.constant 0 : i32
    %c0_i32_1 = arith.constant 0 : i32
    return %c0_i32, %c0_i32_0 : i32, i32
  }
  func.func @transform_2(%arg0: i32) -> (i32, i32) {
    %c0_i32 = arith.constant 0 : i32
    %c0_i32_0 = arith.constant 0 : i32
    %c0_i32_1 = arith.constant 0 : i32
    return %c0_i32, %c0_i32_0 : i32, i32
  }
  func.func @transform_3(%arg0: i32) -> (i32, i32) {
    %c0_i32 = arith.constant 0 : i32
    %c0_i32_0 = arith.constant 0 : i32
    %c0_i32_1 = arith.constant 0 : i32
    return %c0_i32, %c0_i32_0 : i32, i32
  }
  func.func @transform_4(%arg0: i32) -> (i32, i32) {
    %c0_i32 = arith.constant 0 : i32
    %c0_i32_0 = arith.constant 0 : i32
    %c0_i32_1 = arith.constant 0 : i32
    return %c0_i32, %c0_i32_0 : i32, i32
  }
  func.func @transform_5(%arg0: i32) -> (i32, i32) {
    %c0_i32 = arith.constant 0 : i32
    %c0_i32_0 = arith.constant 0 : i32
    %c0_i32_1 = arith.constant 0 : i32
    return %c0_i32, %c0_i32_0 : i32, i32
  }
  func.func @transform_6(%arg0: i32) -> (i32, i32) {
    %c0_i32 = arith.constant 0 : i32
    %c0_i32_0 = arith.constant 0 : i32
    %c0_i32_1 = arith.constant 0 : i32
    return %c0_i32, %c0_i32_0 : i32, i32
  }
  func.func @transform_7(%arg0: i32) -> (i32, i32) {
    %c0_i32 = arith.constant 0 : i32
    %c0_i32_0 = arith.constant 0 : i32
    return %arg0, %c0_i32 : i32, i32
  }
}

module attributes {stable_mosaic.version = 11 : i64} {
  func.func @ffn_kernel(%arg0: i32, %arg1: memref<16x32xf32, #tpu.memory_space<vmem>>, %arg2: memref<32x64xbf16, #tpu.memory_space<vmem>>, %arg3: memref<1x64xf32, #tpu.memory_space<vmem>>, %arg4: memref<64x32xbf16, #tpu.memory_space<vmem>>, %arg5: memref<1x32xf32, #tpu.memory_space<vmem>>, %arg6: memref<1x32xf32, #tpu.memory_space<vmem>>, %arg7: memref<1x32xf32, #tpu.memory_space<vmem>>, %arg8: memref<16x32xf32, #tpu.memory_space<vmem>>, %arg9: memref<16x32xf32, #tpu.memory_space<vmem>>) attributes {dimension_semantics = [#tpu.dimension_semantics<parallel>], iteration_bounds = array<i64: 1>, scalar_prefetch = 0 : i64, scratch_operands = 1 : i64, tpu.core_type = #tpu.core_type<tc>, window_params = [{transform_indices = @transform_0, window_bounds = array<i64: 16, 32>}, {pipeline_mode = #tpu.pipeline_mode<synchronous>, transform_indices = @transform_1, window_bounds = array<i64: 32, 64>}, {pipeline_mode = #tpu.pipeline_mode<synchronous>, transform_indices = @transform_2, window_bounds = array<i64: 1, 64>}, {pipeline_mode = #tpu.pipeline_mode<synchronous>, transform_indices = @transform_3, window_bounds = array<i64: 64, 32>}, {pipeline_mode = #tpu.pipeline_mode<synchronous>, transform_indices = @transform_4, window_bounds = array<i64: 1, 32>}, {pipeline_mode = #tpu.pipeline_mode<synchronous>, transform_indices = @transform_5, window_bounds = array<i64: 1, 32>}, {pipeline_mode = #tpu.pipeline_mode<synchronous>, transform_indices = @transform_6, window_bounds = array<i64: 1, 32>}, {transform_indices = @transform_7, window_bounds = array<i64: 16, 32>}]} {
    %c0 = arith.constant 0 : index
    %c0_0 = arith.constant 0 : index
    %0 = vector.load %arg1[%c0, %c0_0] : memref<16x32xf32, #tpu.memory_space<vmem>>, vector<16x32xf32>
    %1 = arith.truncf %0 : vector<16x32xf32> to vector<16x32xbf16>
    %cst = arith.constant 0.000000e+00 : f32
    %2 = vector.broadcast %cst : f32 to vector<16x32xf32>
    %c0_1 = arith.constant 0 : index
    %c0_2 = arith.constant 0 : index
    %3 = vector.load %arg9[%c0_1, %c0_2] : memref<16x32xf32, #tpu.memory_space<vmem>>, vector<16x32xf32>
    tpu.vector_store %arg9[%c0_1, %c0_2], %2 {strides = array<i32>} : memref<16x32xf32, #tpu.memory_space<vmem>>, vector<16x32xf32>,
    %c0_3 = arith.constant 0 : index
    %c0_4 = arith.constant 0 : index
    %4 = vector.load %arg2[%c0_3, %c0_4] : memref<32x64xbf16, #tpu.memory_space<vmem>>, vector<32x64xbf16>
    %cst_5 = arith.constant dense<0.000000e+00> : vector<16x64xf32>
    %5 = tpu.matmul %1, %4, %cst_5 {dimension_numbers = #tpu.dot_dimension_numbers<[1], [0], [0], [1], [0, 0, 1, 1], [], []>} : vector<16x32xbf16>, vector<32x64xbf16>, vector<16x64xf32> -> vector<16x64xf32>
    %c0_6 = arith.constant 0 : index
    %c0_7 = arith.constant 0 : index
    %6 = vector.load %arg3[%c0_6, %c0_7] : memref<1x64xf32, #tpu.memory_space<vmem>>, vector<1x64xf32>
    %7 = vector.broadcast %6 : vector<1x64xf32> to vector<16x64xf32>
    %8 = arith.addf %5, %7 : vector<16x64xf32>
    %cst_8 = arith.constant 0.000000e+00 : f32
    %9 = vector.broadcast %cst_8 : f32 to vector<16x64xf32>
    %10 = arith.maximumf %8, %9 : vector<16x64xf32>
    %c0_9 = arith.constant 0 : index
    %c0_10 = arith.constant 0 : index
    %11 = vector.load %arg9[%c0_9, %c0_10] : memref<16x32xf32, #tpu.memory_space<vmem>>, vector<16x32xf32>
    %12 = arith.truncf %10 : vector<16x64xf32> to vector<16x64xbf16>
    %c0_11 = arith.constant 0 : index
    %c0_12 = arith.constant 0 : index
    %13 = vector.load %arg4[%c0_11, %c0_12] : memref<64x32xbf16, #tpu.memory_space<vmem>>, vector<64x32xbf16>
    %cst_13 = arith.constant dense<0.000000e+00> : vector<16x32xf32>
    %14 = tpu.matmul %12, %13, %cst_13 {dimension_numbers = #tpu.dot_dimension_numbers<[1], [0], [0], [1], [0, 0, 1, 1], [], []>} : vector<16x64xbf16>, vector<64x32xbf16>, vector<16x32xf32> -> vector<16x32xf32>
    %15 = arith.addf %11, %14 : vector<16x32xf32>
    %c0_14 = arith.constant 0 : index
    %c0_15 = arith.constant 0 : index
    %16 = vector.load %arg9[%c0_14, %c0_15] : memref<16x32xf32, #tpu.memory_space<vmem>>, vector<16x32xf32>
    tpu.vector_store %arg9[%c0_14, %c0_15], %15 {strides = array<i32>} : memref<16x32xf32, #tpu.memory_space<vmem>>, vector<16x32xf32>,
    %c0_16 = arith.constant 0 : index
    %c0_17 = arith.constant 0 : index
    %17 = vector.load %arg9[%c0_16, %c0_17] : memref<16x32xf32, #tpu.memory_space<vmem>>, vector<16x32xf32>
    %c0_18 = arith.constant 0 : index
    %c0_19 = arith.constant 0 : index
    %18 = vector.load %arg5[%c0_18, %c0_19] : memref<1x32xf32, #tpu.memory_space<vmem>>, vector<1x32xf32>
    %19 = vector.broadcast %18 : vector<1x32xf32> to vector<16x32xf32>
    %20 = arith.addf %17, %19 : vector<16x32xf32>
    %21 = arith.addf %20, %0 : vector<16x32xf32>
    %cst_20 = arith.constant dense<0.000000e+00> : vector<16xf32>
    %22 = vector.multi_reduction <add>, %21, %cst_20 [1] : vector<16x32xf32> to vector<16xf32>
    %23 = vector.shape_cast %22 : vector<16xf32> to vector<16x1xf32>
    %cst_21 = arith.constant 3.200000e+01 : f32
    %24 = vector.broadcast %cst_21 : f32 to vector<16x1xf32>
    %25 = arith.divf %23, %24 : vector<16x1xf32>
    %26 = vector.broadcast %25 : vector<16x1xf32> to vector<16x32xf32>
    %27 = arith.subf %21, %26 : vector<16x32xf32>
    %28 = arith.mulf %27, %27 : vector<16x32xf32>
    %cst_22 = arith.constant dense<0.000000e+00> : vector<16xf32>
    %29 = vector.multi_reduction <add>, %28, %cst_22 [1] : vector<16x32xf32> to vector<16xf32>
    %30 = vector.shape_cast %29 : vector<16xf32> to vector<16x1xf32>
    %cst_23 = arith.constant 3.200000e+01 : f32
    %31 = vector.broadcast %cst_23 : f32 to vector<16x1xf32>
    %32 = arith.divf %30, %31 : vector<16x1xf32>
    %cst_24 = arith.constant 9.99999974E-6 : f32
    %33 = vector.broadcast %cst_24 : f32 to vector<16x1xf32>
    %34 = arith.addf %32, %33 : vector<16x1xf32>
    %35 = math.rsqrt %34 : vector<16x1xf32>
    %36 = vector.broadcast %35 : vector<16x1xf32> to vector<16x32xf32>
    %37 = arith.mulf %27, %36 : vector<16x32xf32>
    %c0_25 = arith.constant 0 : index
    %c0_26 = arith.constant 0 : index
    %38 = vector.load %arg6[%c0_25, %c0_26] : memref<1x32xf32, #tpu.memory_space<vmem>>, vector<1x32xf32>
    %39 = vector.broadcast %38 : vector<1x32xf32> to vector<16x32xf32>
    %40 = arith.mulf %37, %39 : vector<16x32xf32>
    %c0_27 = arith.constant 0 : index
    %c0_28 = arith.constant 0 : index
    %41 = vector.load %arg7[%c0_27, %c0_28] : memref<1x32xf32, #tpu.memory_space<vmem>>, vector<1x32xf32>
    %42 = vector.broadcast %41 : vector<1x32xf32> to vector<16x32xf32>
    %43 = arith.addf %40, %42 : vector<16x32xf32>
    %c0_29 = arith.constant 0 : index
    %c0_30 = arith.constant 0 : index
    %44 = vector.load %arg8[%c0_29, %c0_30] : memref<16x32xf32, #tpu.memory_space<vmem>>, vector<16x32xf32>
    tpu.vector_store %arg8[%c0_29, %c0_30], %43 {strides = array<i32>} : memref<16x32xf32, #tpu.memory_space<vmem>>, vector<16x32xf32>,
    return
  }
  func.func @transform_0(%arg0: i32) -> (i32, i32) {
    %c0_i32 = arith.constant 0 : i32
    %c0_i32_0 = arith.constant 0 : i32
    return %arg0, %c0_i32 : i32, i32
  }
  func.func @transform_1(%arg0: i32) -> (i32, i32) {
    %c0_i32 = arith.constant 0 : i32
    %c0_i32_0 = arith.constant 0 : i32
    %c0_i32_1 = arith.constant 0 : i32
    return %c0_i32, %c0_i32_0 : i32, i32
  }
  func.func @transform_2(%arg0: i32) -> (i32, i32) {
    %c0_i32 = arith.constant 0 : i32
    %c0_i32_0 = arith.constant 0 : i32
    %c0_i32_1 = arith.constant 0 : i32
    return %c0_i32, %c0_i32_0 : i32, i32
  }
  func.func @transform_3(%arg0: i32) -> (i32, i32) {
    %c0_i32 = arith.constant 0 : i32
    %c0_i32_0 = arith.constant 0 : i32
    %c0_i32_1 = arith.constant 0 : i32
    return %c0_i32, %c0_i32_0 : i32, i32
  }
  func.func @transform_4(%arg0: i32) -> (i32, i32) {
    %c0_i32 = arith.constant 0 : i32
    %c0_i32_0 = arith.constant 0 : i32
    %c0_i32_1 = arith.constant 0 : i32
    return %c0_i32, %c0_i32_0 : i32, i32
  }
  func.func @transform_5(%arg0: i32) -> (i32, i32) {
    %c0_i32 = arith.constant 0 : i32
    %c0_i32_0 = arith.constant 0 : i32
    %c0_i32_1 = arith.constant 0 : i32
    return %c0_i32, %c0_i32_0 : i32, i32
  }
  func.func @transform_6(%arg0: i32) -> (i32, i32) {
    %c0_i32 = arith.constant 0 : i32
    %c0_i32_0 = arith.constant 0 : i32
    %c0_i32_1 = arith.constant 0 : i32
    return %c0_i32, %c0_i32_0 : i32, i32
  }
  func.func @transform_7(%arg0: i32) -> (i32, i32) {
    %c0_i32 = arith.constant 0 : i32
    %c0_i32_0 = arith.constant 0 : i32
    return %arg0, %c0_i32 : i32, i32
  }
}

</mosaic_0001>

<llo_original>
// kernel: tpu_custom_call.1
$region0: #{tpu_custom_call.1}
  #allocation0 [shape = 'u32[]', space=smem, size = 0x4, offset = 0x4, fixed_abs, tag = 'smem constant byte address 0x4 - core index']
  #allocation1 [shape = 'u32[144,128]{1,0:T(1,128)}', space=vmem, size = 0x12000, scoped, tag = 'internal scratch']
  #allocation2 [shape = 'f32[16,32]{1,0:T(8,128)}', space=vmem, size = 0x2000, scoped, tag = 'scratch operand']
  %s0 = inlined_call_operand.vmem [shape: f32[16,32], index: 0, kind: input, shape index: {}]
  %s1 = inlined_call_operand.vmem [shape: bf16[32,64], index: 1, kind: input, shape index: {}]
  %s2 = inlined_call_operand.vmem [shape: f32[1,64], index: 2, kind: input, shape index: {}]
  %s3 = inlined_call_operand.vmem [shape: bf16[64,32], index: 3, kind: input, shape index: {}]
  %s4 = inlined_call_operand.vmem [shape: f32[1,32], index: 4, kind: input, shape index: {}]
  %s5 = inlined_call_operand.vmem [shape: f32[1,32], index: 5, kind: input, shape index: {}]
  %s6 = inlined_call_operand.vmem [shape: f32[1,32], index: 6, kind: input, shape index: {}]
  %s7 = inlined_call_operand.hbm [shape: f32[16,32], index: 7, kind: output, shape index: {}]
  %s8 = sld [smem:[#allocation0]]
  $region38: #{tpu_custom_call.1} parent=0
    _
  %s10 = ssub.s32 1, %s8
  %s11 = scalar_select 0, %s10, %s8
  $region1: #{tpu_custom_call.1} parent=0
    #allocation3 [shape = 'u8[8192]{0}', space=vmem, size = 0x2000, scoped, tag = 'output window, operand 0, single buffered']
    #allocation4 [shape = 's32[1]{0}', space=sflag, size = 0x4, scoped, tag = 'scoped memory for tpu_custom_call.1']
    %12 = vsyncpa [#allocation4], 0
    // Predicated region
    $region2: #{tpu_custom_call.1} parent=1 // pred_check
      _
    $region3: #{tpu_custom_call.1} parent=1 // pred_check_branch
      %14 = sbr.rel (0) target = $region5
    $region4: #{tpu_custom_call.1} parent=1 // pred_region
      _
    $region5: #{tpu_custom_call.1} parent=1 // pred_fallthru
      _
    // Predicated region
    $region6: #{tpu_custom_call.1} parent=1 // pred_check
      _
    $region7: #{tpu_custom_call.1} parent=1 // pred_check_branch
      %16 = sbr.rel (0) target = $region9
    $region8: #{tpu_custom_call.1} parent=1 // pred_region
      _
    $region9: #{tpu_custom_call.1} parent=1 // pred_fallthru
      _
    // Predicated region
    $region10: #{tpu_custom_call.1} parent=1 // pred_check
      _
    $region11: #{tpu_custom_call.1} parent=1 // pred_check_branch
      %18 = sbr.rel (0) target = $region13
    $region12: #{tpu_custom_call.1} parent=1 // pred_region
      _
    $region13: #{tpu_custom_call.1} parent=1 // pred_fallthru
      _
    // Predicated region
    $region14: #{tpu_custom_call.1} parent=1 // pred_check
      _
    $region15: #{tpu_custom_call.1} parent=1 // pred_check_branch
      %20 = sbr.rel (0) target = $region17
    $region16: #{tpu_custom_call.1} parent=1 // pred_region
      _
    $region17: #{tpu_custom_call.1} parent=1 // pred_fallthru
      _
    // Predicated region
    $region18: #{tpu_custom_call.1} parent=1 // pred_check
      _
    $region19: #{tpu_custom_call.1} parent=1 // pred_check_branch
      %22 = sbr.rel (0) target = $region21
    $region20: #{tpu_custom_call.1} parent=1 // pred_region
      _
    $region21: #{tpu_custom_call.1} parent=1 // pred_fallthru
      _
    // Predicated region
    $region22: #{tpu_custom_call.1} parent=1 // pred_check
      _
    $region23: #{tpu_custom_call.1} parent=1 // pred_check_branch
      %24 = sbr.rel (0) target = $region25
    $region24: #{tpu_custom_call.1} parent=1 // pred_region
      _
    $region25: #{tpu_custom_call.1} parent=1 // pred_fallthru
      _
    // Predicated region
    $region26: #{tpu_custom_call.1} parent=1 // pred_check
      _
    $region27: #{tpu_custom_call.1} parent=1 // pred_check_branch
      %26 = sbr.rel (0) target = $region29
    $region28: #{tpu_custom_call.1} parent=1 // pred_region
      _
    $region29: #{tpu_custom_call.1} parent=1 // pred_fallthru
      _
    %v28 = vld [vmem:[%s0] sm:$0xff]
    %v29 = vld [vmem:[%s0 + $0x8] sm:$0xff]
    %v30 = vpack.c.bf16 %v29, %v28
    %vm31 = vcmask 261120
    %32 = vst.msk [vmem:[#allocation2] sm:$0xff] %vm31, 0.0
    %33 = vst.msk [vmem:[#allocation2 + $0x8] sm:$0xff] %vm31, 0.0
    %v34 = vld [vmem:[%s1] sm:$0xf]
    %v35 = vld [vmem:[%s1 + $0x4] sm:$0xf]
    %v36 = vld [vmem:[%s1 + $0x8] sm:$0xf]
    %v37 = vld [vmem:[%s1 + $0xc] sm:$0xf]
    %v38 = vld [vmem:[%s2] sm:$0x1]
    %v40 = vlaneseq
    %v41 = vshrl.u32 %v40, 7
    %v42 = vsub.s32 0, %v41
    %v43 = vrot.slane %v38, %v42
    %v49 = vunpack.c.l.b16 %v34
    %v50 = vunpack.c.l.b16 %v35
    %v51 = vunpack.c.l.b16 %v36
    %v52 = vunpack.c.l.b16 %v37
    %v53 = vpack.c.b16 %v50, %v49
    %v54 = vpack.c.b16 %v52, %v51
    %v58 = vsel %vm31, %v30, 0
    %60 = vmatprep.subr.bf16.mxu0 0
    %61 = vmatpush1.bf16.msra.mxu0 %v53
    %62 = vmatprep.subr.bf16.mxu0 0
    %63 = vmatpush1.bf16.msra.mxu0 %v54
    %64 = vmatprep.subr.bf16.mxu0 0
    %65 = vmatpush1.bf16.msra.mxu0 0
    %66 = vmatprep.subr.bf16.mxu0 0
    %67 = vmatpush1.bf16.msra.mxu0 0
    %68 = vmatprep.subr.bf16.mxu0 0
    %69 = vmatpush1.bf16.msra.mxu0 0
    %70 = vmatprep.subr.bf16.mxu0 0
    %71 = vmatpush1.bf16.msra.mxu0 0
    %72 = vmatprep.subr.bf16.mxu0 0
    %73 = vmatpush1.bf16.msra.mxu0 0
    %74 = vmatprep.subr.bf16.mxu0 0
    %75 = vmatpush1.bf16.msra.mxu0 0
    %76 = vmatprep.subr.bf16.mxu0 0
    %77 = vmatpush1.bf16.msra.mxu0 0
    %78 = vmatprep.subr.bf16.mxu0 0
    %79 = vmatpush1.bf16.msra.mxu0 0
    %80 = vmatprep.subr.bf16.mxu0 0
    %81 = vmatpush1.bf16.msra.mxu0 0
    %82 = vmatprep.subr.bf16.mxu0 0
    %83 = vmatpush1.bf16.msra.mxu0 0
    %84 = vmatprep.subr.bf16.mxu0 0
    %85 = vmatpush1.bf16.msra.mxu0 0
    %86 = vmatprep.subr.bf16.mxu0 0
    %87 = vmatpush1.bf16.msra.mxu0 0
    %88 = vmatprep.subr.bf16.mxu0 0
    %89 = vmatpush1.bf16.msra.mxu0 0
    %90 = vmatprep.subr.bf16.mxu0 0
    %91 = vmatpush1.bf16.msra.mxu0 0
    %92 = vmatprep.mubr.bf16.mxu0 0
    %93 = vmatmul.mubr.bf16.gmra.mrb[0].mxu0 %v58
    %v94 = vpop.f32.mrb[0].mxu0
    %v95 = vadd.f32 %v43, %v94
    %v96 = vpop.f32.mrb[0].mxu0
    %v97 = vpop.f32.mrb[0].mxu0
    %v98 = vadd.f32 %v43, %v97
    %v99 = vpop.f32.mrb[0].mxu0
    %100 = vdwg.mxu0
    %v101 = vmax.f32 %v95, 0.0
    %v102 = vmax.f32 %v98, 0.0
    %v103 = vld [vmem:[#allocation2] sm:$0xff]
    %v104 = vld [vmem:[#allocation2 + $0x8] sm:$0xff]
    %v105 = vpack.c.bf16 %v102, %v101
    %v106 = vld [vmem:[%s3] sm:$0xf]
    %v107 = vld [vmem:[%s3 + $0x4] sm:$0xf]
    %v108 = vld [vmem:[%s3 + $0x8] sm:$0xf]
    %v109 = vld [vmem:[%s3 + $0xc] sm:$0xf]
    %v110 = vld [vmem:[%s3 + $0x10] sm:$0xf]
    %v111 = vld [vmem:[%s3 + $0x14] sm:$0xf]
    %v112 = vld [vmem:[%s3 + $0x18] sm:$0xf]
    %v113 = vld [vmem:[%s3 + $0x1c] sm:$0xf]
    %v122 = vunpack.c.l.b16 %v106
    %v123 = vunpack.c.l.b16 %v107
    %v124 = vunpack.c.l.b16 %v108
    %v125 = vunpack.c.l.b16 %v109
    %v126 = vunpack.c.l.b16 %v110
    %v127 = vunpack.c.l.b16 %v111
    %v128 = vunpack.c.l.b16 %v112
    %v129 = vunpack.c.l.b16 %v113
    %v130 = vpack.c.b16 %v123, %v122
    %v131 = vpack.c.b16 %v125, %v124
    %v132 = vpack.c.b16 %v127, %v126
    %v133 = vpack.c.b16 %v129, %v128
    %vm138 = vcmask 523264
    %v140 = vsel %vm138, %v105, 0
    %142 = vmatprep.subr.bf16.mxu0 0
    %143 = vmatpush1.bf16.msra.mxu0 %v130
    %144 = vmatprep.subr.bf16.mxu0 0
    %145 = vmatpush1.bf16.msra.mxu0 %v131
    %146 = vmatprep.subr.bf16.mxu0 0
    %147 = vmatpush1.bf16.msra.mxu0 %v132
    %148 = vmatprep.subr.bf16.mxu0 0
    %149 = vmatpush1.bf16.msra.mxu0 %v133
    %150 = vmatprep.subr.bf16.mxu0 0
    %151 = vmatpush1.bf16.msra.mxu0 0
    %152 = vmatprep.subr.bf16.mxu0 0
    %153 = vmatpush1.bf16.msra.mxu0 0
    %154 = vmatprep.subr.bf16.mxu0 0
    %155 = vmatpush1.bf16.msra.mxu0 0
    %156 = vmatprep.subr.bf16.mxu0 0
    %157 = vmatpush1.bf16.msra.mxu0 0
    %158 = vmatprep.subr.bf16.mxu0 0
    %159 = vmatpush1.bf16.msra.mxu0 0
    %160 = vmatprep.subr.bf16.mxu0 0
    %161 = vmatpush1.bf16.msra.mxu0 0
    %162 = vmatprep.subr.bf16.mxu0 0
    %163 = vmatpush1.bf16.msra.mxu0 0
    %164 = vmatprep.subr.bf16.mxu0 0
    %165 = vmatpush1.bf16.msra.mxu0 0
    %166 = vmatprep.subr.bf16.mxu0 0
    %167 = vmatpush1.bf16.msra.mxu0 0
    %168 = vmatprep.subr.bf16.mxu0 0
    %169 = vmatpush1.bf16.msra.mxu0 0
    %170 = vmatprep.subr.bf16.mxu0 0
    %171 = vmatpush1.bf16.msra.mxu0 0
    %172 = vmatprep.subr.bf16.mxu0 0
    %173 = vmatpush1.bf16.msra.mxu0 0
    %174 = vmatprep.mubr.bf16.mxu0 0
    %175 = vmatmul.mubr.bf16.gmra.mrb[0].mxu0 %v140
    %v176 = vpop.f32.mrb[0].mxu0
    %v177 = vadd.f32 0.0, %v176
    %v178 = vpop.f32.mrb[0].mxu0
    %v179 = vpop.f32.mrb[0].mxu0
    %v180 = vadd.f32 0.0, %v179
    %v181 = vpop.f32.mrb[0].mxu0
    %182 = vdwg.mxu0
    %v183 = vadd.f32 %v103, %v177
    %v184 = vadd.f32 %v104, %v180
    %185 = vst.msk [vmem:[#allocation2] sm:$0xff] %vm31, %v183
    %186 = vst.msk [vmem:[#allocation2 + $0x8] sm:$0xff] %vm31, %v184
    %v187 = vld [vmem:[#allocation2] sm:$0xff]
    %v188 = vld [vmem:[#allocation2 + $0x8] sm:$0xff]
    %v189 = vld [vmem:[%s4] sm:$0x1]
    %v191 = vlaneseq
    %v192 = vshrl.u32 %v191, 7
    %v193 = vsub.s32 0, %v192
    %v194 = vrot.slane %v189, %v193
    %v196 = vadd.f32 %v187, %v194
    %v197 = vadd.f32 %v188, %v194
    %v198 = vadd.f32 %v196, %v28
    %v199 = vadd.f32 %v197, %v29
    %v200 = vsel %vm31, %v198, 0.0
    %201 = vadd.xlane.f32.xlu0 %v200
    %v202 = vpop.xlane.xlu0 %201
    %v203 = vsel %vm31, %v199, 0.0
    %204 = vadd.xlane.f32.xlu0 %v203
    %v205 = vpop.xlane.xlu0 %204
    %v206 = vrcp.pop 32.0
    %v207 = vmul.f32 %v202, %v206
    %v208 = vmul.f32 %v205, %v206
    %v209 = vsub.f32 %v198, %v207
    %v210 = vsub.f32 %v199, %v208
    %v211 = vmul.f32 %v209, %v209
    %v212 = vmul.f32 %v210, %v210
    %v213 = vsel %vm31, %v211, 0.0
    %214 = vadd.xlane.f32.xlu0 %v213
    %v215 = vpop.xlane.xlu0 %214
    %v216 = vsel %vm31, %v212, 0.0
    %217 = vadd.xlane.f32.xlu0 %v216
    %v218 = vpop.xlane.xlu0 %217
    %v219 = vmul.f32 %v215, %v206
    %v220 = vmul.f32 %v218, %v206
    %v221 = vadd.f32 %v219, 1e-05
    %v222 = vadd.f32 %v220, 1e-05
    %v223 = vrsqrt.pop %v221
    %v224 = vrsqrt.pop %v222
    %v225 = vmul.f32 %v209, %v223
    %v226 = vmul.f32 %v210, %v224
    %v227 = vld [vmem:[%s5] sm:$0x1]
    %v229 = vlaneseq
    %v230 = vshrl.u32 %v229, 7
    %v231 = vsub.s32 0, %v230
    %v232 = vrot.slane %v227, %v231
    %v234 = vmul.f32 %v225, %v232
    %v235 = vmul.f32 %v226, %v232
    %v236 = vld [vmem:[%s6] sm:$0x1]
    %v238 = vlaneseq
    %v239 = vshrl.u32 %v238, 7
    %v240 = vsub.s32 0, %v239
    %v241 = vrot.slane %v236, %v240
    %v243 = vadd.f32 %v234, %v241
    %v244 = vadd.f32 %v235, %v241
    %245 = vst.msk [vmem:[#allocation3] sm:$0xff] %vm31, %v243
    %246 = vst.msk [vmem:[#allocation3 + $0x8] sm:$0xff] %vm31, %v244
    // Predicated region
    $region30: #{tpu_custom_call.1} parent=1 // pred_check
      _
    $region31: #{tpu_custom_call.1} parent=1 // pred_check_branch
      %248 = sbr.rel (0) target = $region33
    $region32: #{tpu_custom_call.1} parent=1 // pred_region
      %s250 = ssub.s32 256, 256
      %251 = vsyncadd [#allocation4], %s250
      %s252 = sshll.u32 [#allocation3], 4
      %s253 = int_to_ptr.vmem [resolvable:$true] %s252
      %258 = dma.vmem_to_hbm [thread:$0]  %s253, 256, %s7, [#allocation4], 128, 128, 8
    $region33: #{tpu_custom_call.1} parent=1 // pred_fallthru
      _
    // Predicated region
    $region34: #{tpu_custom_call.1} parent=1 // pred_check
      _
    $region35: #{tpu_custom_call.1} parent=1 // pred_check_branch
      %260 = sbr.rel (0) target = $region37
    $region36: #{tpu_custom_call.1} parent=1 // pred_region
      %261 = dma.done [#allocation4], 256
    $region37: #{tpu_custom_call.1} parent=1 // pred_fallthru
      _
    %262 = vsyncpa [#allocation4], 1

// kernel: tpu_custom_call.1
$region0: #{tpu_custom_call.1}
  #allocation0 [shape = 'u32[]', space=smem, size = 0x4, offset = 0x4, fixed_abs, tag = 'smem constant byte address 0x4 - core index']
  #allocation1 [shape = 'u32[144,128]{1,0:T(1,128)}', space=vmem, size = 0x12000, scoped, tag = 'internal scratch']
  #allocation2 [shape = 'f32[16,32]{1,0:T(8,128)}', space=vmem, size = 0x2000, scoped, tag = 'scratch operand']
  %s0 = inlined_call_operand.vmem [shape: f32[16,32], index: 0, kind: input, shape index: {}]
  %s1 = inlined_call_operand.vmem [shape: bf16[32,64], index: 1, kind: input, shape index: {}]
  %s2 = inlined_call_operand.vmem [shape: f32[1,64], index: 2, kind: input, shape index: {}]
  %s3 = inlined_call_operand.vmem [shape: bf16[64,32], index: 3, kind: input, shape index: {}]
  %s4 = inlined_call_operand.vmem [shape: f32[1,32], index: 4, kind: input, shape index: {}]
  %s5 = inlined_call_operand.vmem [shape: f32[1,32], index: 5, kind: input, shape index: {}]
  %s6 = inlined_call_operand.vmem [shape: f32[1,32], index: 6, kind: input, shape index: {}]
  %s7 = inlined_call_operand.hbm [shape: f32[16,32], index: 7, kind: output, shape index: {}]
  %s8 = sld [smem:[#allocation0]]
  $region38: #{tpu_custom_call.1} parent=0
    _
  %s10 = ssub.s32 1, %s8
  %s11 = scalar_select 0, %s10, %s8
  $region1: #{tpu_custom_call.1} parent=0
    #allocation3 [shape = 'u8[8192]{0}', space=vmem, size = 0x2000, scoped, tag = 'output window, operand 0, single buffered']
    #allocation4 [shape = 's32[1]{0}', space=sflag, size = 0x4, scoped, tag = 'scoped memory for tpu_custom_call.1']
    %12 = vsyncpa [#allocation4], 0
    // Predicated region
    $region2: #{tpu_custom_call.1} parent=1 // pred_check
      _
    $region3: #{tpu_custom_call.1} parent=1 // pred_check_branch
      %14 = sbr.rel (0) target = $region5
    $region4: #{tpu_custom_call.1} parent=1 // pred_region
      _
    $region5: #{tpu_custom_call.1} parent=1 // pred_fallthru
      _
    // Predicated region
    $region6: #{tpu_custom_call.1} parent=1 // pred_check
      _
    $region7: #{tpu_custom_call.1} parent=1 // pred_check_branch
      %16 = sbr.rel (0) target = $region9
    $region8: #{tpu_custom_call.1} parent=1 // pred_region
      _
    $region9: #{tpu_custom_call.1} parent=1 // pred_fallthru
      _
    // Predicated region
    $region10: #{tpu_custom_call.1} parent=1 // pred_check
      _
    $region11: #{tpu_custom_call.1} parent=1 // pred_check_branch
      %18 = sbr.rel (0) target = $region13
    $region12: #{tpu_custom_call.1} parent=1 // pred_region
      _
    $region13: #{tpu_custom_call.1} parent=1 // pred_fallthru
      _
    // Predicated region
    $region14: #{tpu_custom_call.1} parent=1 // pred_check
      _
    $region15: #{tpu_custom_call.1} parent=1 // pred_check_branch
      %20 = sbr.rel (0) target = $region17
    $region16: #{tpu_custom_call.1} parent=1 // pred_region
      _
    $region17: #{tpu_custom_call.1} parent=1 // pred_fallthru
      _
    // Predicated region
    $region18: #{tpu_custom_call.1} parent=1 // pred_check
      _
    $region19: #{tpu_custom_call.1} parent=1 // pred_check_branch
      %22 = sbr.rel (0) target = $region21
    $region20: #{tpu_custom_call.1} parent=1 // pred_region
      _
    $region21: #{tpu_custom_call.1} parent=1 // pred_fallthru
      _
    // Predicated region
    $region22: #{tpu_custom_call.1} parent=1 // pred_check
      _
    $region23: #{tpu_custom_call.1} parent=1 // pred_check_branch
      %24 = sbr.rel (0) target = $region25
    $region24: #{tpu_custom_call.1} parent=1 // pred_region
      _
    $region25: #{tpu_custom_call.1} parent=1 // pred_fallthru
      _
    // Predicated region
    $region26: #{tpu_custom_call.1} parent=1 // pred_check
      _
    $region27: #{tpu_custom_call.1} parent=1 // pred_check_branch
      %26 = sbr.rel (0) target = $region29
    $region28: #{tpu_custom_call.1} parent=1 // pred_region
      _
    $region29: #{tpu_custom_call.1} parent=1 // pred_fallthru
      _
    %v28 = vld [vmem:[%s0] sm:$0xff]
    %v29 = vld [vmem:[%s0 + $0x8] sm:$0xff]
    %v30 = vpack.c.bf16 %v29, %v28
    %vm31 = vcmask 261120
    %32 = vst.msk [vmem:[#allocation2] sm:$0xff] %vm31, 0.0
    %33 = vst.msk [vmem:[#allocation2 + $0x8] sm:$0xff] %vm31, 0.0
    %v34 = vld [vmem:[%s1] sm:$0xf]
    %v35 = vld [vmem:[%s1 + $0x4] sm:$0xf]
    %v36 = vld [vmem:[%s1 + $0x8] sm:$0xf]
    %v37 = vld [vmem:[%s1 + $0xc] sm:$0xf]
    %v38 = vld [vmem:[%s2] sm:$0x1]
    %v40 = vlaneseq
    %v41 = vshrl.u32 %v40, 7
    %v42 = vsub.s32 0, %v41
    %v43 = vrot.slane %v38, %v42
    %v49 = vunpack.c.l.b16 %v34
    %v50 = vunpack.c.l.b16 %v35
    %v51 = vunpack.c.l.b16 %v36
    %v52 = vunpack.c.l.b16 %v37
    %v53 = vpack.c.b16 %v50, %v49
    %v54 = vpack.c.b16 %v52, %v51
    %v58 = vsel %vm31, %v30, 0
    %60 = vmatprep.subr.bf16.mxu0 0
    %61 = vmatpush1.bf16.msra.mxu0 %v53
    %62 = vmatprep.subr.bf16.mxu0 0
    %63 = vmatpush1.bf16.msra.mxu0 %v54
    %64 = vmatprep.subr.bf16.mxu0 0
    %65 = vmatpush1.bf16.msra.mxu0 0
    %66 = vmatprep.subr.bf16.mxu0 0
    %67 = vmatpush1.bf16.msra.mxu0 0
    %68 = vmatprep.subr.bf16.mxu0 0
    %69 = vmatpush1.bf16.msra.mxu0 0
    %70 = vmatprep.subr.bf16.mxu0 0
    %71 = vmatpush1.bf16.msra.mxu0 0
    %72 = vmatprep.subr.bf16.mxu0 0
    %73 = vmatpush1.bf16.msra.mxu0 0
    %74 = vmatprep.subr.bf16.mxu0 0
    %75 = vmatpush1.bf16.msra.mxu0 0
    %76 = vmatprep.subr.bf16.mxu0 0
    %77 = vmatpush1.bf16.msra.mxu0 0
    %78 = vmatprep.subr.bf16.mxu0 0
    %79 = vmatpush1.bf16.msra.mxu0 0
    %80 = vmatprep.subr.bf16.mxu0 0
    %81 = vmatpush1.bf16.msra.mxu0 0
    %82 = vmatprep.subr.bf16.mxu0 0
    %83 = vmatpush1.bf16.msra.mxu0 0
    %84 = vmatprep.subr.bf16.mxu0 0
    %85 = vmatpush1.bf16.msra.mxu0 0
    %86 = vmatprep.subr.bf16.mxu0 0
    %87 = vmatpush1.bf16.msra.mxu0 0
    %88 = vmatprep.subr.bf16.mxu0 0
    %89 = vmatpush1.bf16.msra.mxu0 0
    %90 = vmatprep.subr.bf16.mxu0 0
    %91 = vmatpush1.bf16.msra.mxu0 0
    %92 = vmatprep.mubr.bf16.mxu0 0
    %93 = vmatmul.mubr.bf16.gmra.mrb[0].mxu0 %v58
    %v94 = vpop.f32.mrb[0].mxu0
    %v95 = vadd.f32 %v43, %v94
    %v96 = vpop.f32.mrb[0].mxu0
    %v97 = vpop.f32.mrb[0].mxu0
    %v98 = vadd.f32 %v43, %v97
    %v99 = vpop.f32.mrb[0].mxu0
    %100 = vdwg.mxu0
    %v101 = vmax.f32 %v95, 0.0
    %v102 = vmax.f32 %v98, 0.0
    %v103 = vld [vmem:[#allocation2] sm:$0xff]
    %v104 = vld [vmem:[#allocation2 + $0x8] sm:$0xff]
    %v105 = vpack.c.bf16 %v102, %v101
    %v106 = vld [vmem:[%s3] sm:$0xf]
    %v107 = vld [vmem:[%s3 + $0x4] sm:$0xf]
    %v108 = vld [vmem:[%s3 + $0x8] sm:$0xf]
    %v109 = vld [vmem:[%s3 + $0xc] sm:$0xf]
    %v110 = vld [vmem:[%s3 + $0x10] sm:$0xf]
    %v111 = vld [vmem:[%s3 + $0x14] sm:$0xf]
    %v112 = vld [vmem:[%s3 + $0x18] sm:$0xf]
    %v113 = vld [vmem:[%s3 + $0x1c] sm:$0xf]
    %v122 = vunpack.c.l.b16 %v106
    %v123 = vunpack.c.l.b16 %v107
    %v124 = vunpack.c.l.b16 %v108
    %v125 = vunpack.c.l.b16 %v109
    %v126 = vunpack.c.l.b16 %v110
    %v127 = vunpack.c.l.b16 %v111
    %v128 = vunpack.c.l.b16 %v112
    %v129 = vunpack.c.l.b16 %v113
    %v130 = vpack.c.b16 %v123, %v122
    %v131 = vpack.c.b16 %v125, %v124
    %v132 = vpack.c.b16 %v127, %v126
    %v133 = vpack.c.b16 %v129, %v128
    %vm138 = vcmask 523264
    %v140 = vsel %vm138, %v105, 0
    %142 = vmatprep.subr.bf16.mxu0 0
    %143 = vmatpush1.bf16.msra.mxu0 %v130
    %144 = vmatprep.subr.bf16.mxu0 0
    %145 = vmatpush1.bf16.msra.mxu0 %v131
    %146 = vmatprep.subr.bf16.mxu0 0
    %147 = vmatpush1.bf16.msra.mxu0 %v132
    %148 = vmatprep.subr.bf16.mxu0 0
    %149 = vmatpush1.bf16.msra.mxu0 %v133
    %150 = vmatprep.subr.bf16.mxu0 0
    %151 = vmatpush1.bf16.msra.mxu0 0
    %152 = vmatprep.subr.bf16.mxu0 0
    %153 = vmatpush1.bf16.msra.mxu0 0
    %154 = vmatprep.subr.bf16.mxu0 0
    %155 = vmatpush1.bf16.msra.mxu0 0
    %156 = vmatprep.subr.bf16.mxu0 0
    %157 = vmatpush1.bf16.msra.mxu0 0
    %158 = vmatprep.subr.bf16.mxu0 0
    %159 = vmatpush1.bf16.msra.mxu0 0
    %160 = vmatprep.subr.bf16.mxu0 0
    %161 = vmatpush1.bf16.msra.mxu0 0
    %162 = vmatprep.subr.bf16.mxu0 0
    %163 = vmatpush1.bf16.msra.mxu0 0
    %164 = vmatprep.subr.bf16.mxu0 0
    %165 = vmatpush1.bf16.msra.mxu0 0
    %166 = vmatprep.subr.bf16.mxu0 0
    %167 = vmatpush1.bf16.msra.mxu0 0
    %168 = vmatprep.subr.bf16.mxu0 0
    %169 = vmatpush1.bf16.msra.mxu0 0
    %170 = vmatprep.subr.bf16.mxu0 0
    %171 = vmatpush1.bf16.msra.mxu0 0
    %172 = vmatprep.subr.bf16.mxu0 0
    %173 = vmatpush1.bf16.msra.mxu0 0
    %174 = vmatprep.mubr.bf16.mxu0 0
    %175 = vmatmul.mubr.bf16.gmra.mrb[0].mxu0 %v140
    %v176 = vpop.f32.mrb[0].mxu0
    %v177 = vadd.f32 0.0, %v176
    %v178 = vpop.f32.mrb[0].mxu0
    %v179 = vpop.f32.mrb[0].mxu0
    %v180 = vadd.f32 0.0, %v179
    %v181 = vpop.f32.mrb[0].mxu0
    %182 = vdwg.mxu0
    %v183 = vadd.f32 %v103, %v177
    %v184 = vadd.f32 %v104, %v180
    %185 = vst.msk [vmem:[#allocation2] sm:$0xff] %vm31, %v183
    %186 = vst.msk [vmem:[#allocation2 + $0x8] sm:$0xff] %vm31, %v184
    %v187 = vld [vmem:[#allocation2] sm:$0xff]
    %v188 = vld [vmem:[#allocation2 + $0x8] sm:$0xff]
    %v189 = vld [vmem:[%s4] sm:$0x1]
    %v191 = vlaneseq
    %v192 = vshrl.u32 %v191, 7
    %v193 = vsub.s32 0, %v192
    %v194 = vrot.slane %v189, %v193
    %v196 = vadd.f32 %v187, %v194
    %v197 = vadd.f32 %v188, %v194
    %v198 = vadd.f32 %v196, %v28
    %v199 = vadd.f32 %v197, %v29
    %v200 = vsel %vm31, %v198, 0.0
    %201 = vadd.xlane.f32.xlu0 %v200
    %v202 = vpop.xlane.xlu0 %201
    %v203 = vsel %vm31, %v199, 0.0
    %204 = vadd.xlane.f32.xlu0 %v203
    %v205 = vpop.xlane.xlu0 %204
    %v206 = vrcp.pop 32.0
    %v207 = vmul.f32 %v202, %v206
    %v208 = vmul.f32 %v205, %v206
    %v209 = vsub.f32 %v198, %v207
    %v210 = vsub.f32 %v199, %v208
    %v211 = vmul.f32 %v209, %v209
    %v212 = vmul.f32 %v210, %v210
    %v213 = vsel %vm31, %v211, 0.0
    %214 = vadd.xlane.f32.xlu0 %v213
    %v215 = vpop.xlane.xlu0 %214
    %v216 = vsel %vm31, %v212, 0.0
    %217 = vadd.xlane.f32.xlu0 %v216
    %v218 = vpop.xlane.xlu0 %217
    %v219 = vmul.f32 %v215, %v206
    %v220 = vmul.f32 %v218, %v206
    %v221 = vadd.f32 %v219, 1e-05
    %v222 = vadd.f32 %v220, 1e-05
    %v223 = vrsqrt.pop %v221
    %v224 = vrsqrt.pop %v222
    %v225 = vmul.f32 %v209, %v223
    %v226 = vmul.f32 %v210, %v224
    %v227 = vld [vmem:[%s5] sm:$0x1]
    %v229 = vlaneseq
    %v230 = vshrl.u32 %v229, 7
    %v231 = vsub.s32 0, %v230
    %v232 = vrot.slane %v227, %v231
    %v234 = vmul.f32 %v225, %v232
    %v235 = vmul.f32 %v226, %v232
    %v236 = vld [vmem:[%s6] sm:$0x1]
    %v238 = vlaneseq
    %v239 = vshrl.u32 %v238, 7
    %v240 = vsub.s32 0, %v239
    %v241 = vrot.slane %v236, %v240
    %v243 = vadd.f32 %v234, %v241
    %v244 = vadd.f32 %v235, %v241
    %245 = vst.msk [vmem:[#allocation3] sm:$0xff] %vm31, %v243
    %246 = vst.msk [vmem:[#allocation3 + $0x8] sm:$0xff] %vm31, %v244
    // Predicated region
    $region30: #{tpu_custom_call.1} parent=1 // pred_check
      _
    $region31: #{tpu_custom_call.1} parent=1 // pred_check_branch
      %248 = sbr.rel (0) target = $region33
    $region32: #{tpu_custom_call.1} parent=1 // pred_region
      %s250 = ssub.s32 256, 256
      %251 = vsyncadd [#allocation4], %s250
      %s252 = sshll.u32 [#allocation3], 4
      %s253 = int_to_ptr.vmem [resolvable:$true] %s252
      %258 = dma.vmem_to_hbm [thread:$0]  %s253, 256, %s7, [#allocation4], 128, 128, 8
    $region33: #{tpu_custom_call.1} parent=1 // pred_fallthru
      _
    // Predicated region
    $region34: #{tpu_custom_call.1} parent=1 // pred_check
      _
    $region35: #{tpu_custom_call.1} parent=1 // pred_check_branch
      %260 = sbr.rel (0) target = $region37
    $region36: #{tpu_custom_call.1} parent=1 // pred_region
      %261 = dma.done [#allocation4], 256
    $region37: #{tpu_custom_call.1} parent=1 // pred_fallthru
      _
    %262 = vsyncpa [#allocation4], 1

</llo_original>
